<compile_context>
chip_gen: v5e
topology: v5e:2x2
jax: 0.10.0
libtpu: 0.0.40
codegen_flags: <defaults>
</compile_context>

<pallas_src>
import functools

import jax
import jax.numpy as jnp
from jax import lax
from jax.experimental import pallas as pl
from jax.experimental.pallas import tpu as pltpu

NEG_SLOPE = 0.2
LANE = 128


def _leaky(x):
    # max(x, 0.2*x) == LeakyReLU(0.2) for slope in [0, 1]; 2 VALU ops.
    return jnp.maximum(x, NEG_SLOPE * x)


def _residual_stack_kernel(xm_ref, lh_ref, rh_ref, w1_ref, w2_ref, ws_ref,
                           b1_ref, b2_ref, out_ref, *, K, dilation, pad,
                           t_last, cdt):
    """One (batch, T-tile) per grid step.  All tiles are (C sublanes, T lanes).

    xm_ref: (1, C, tT)    raw input, columns [j*tT, (j+1)*tT)
    lh_ref: (1, C, 128)   columns [j*tT - 128, j*tT)   (clamped to block 0 at j==0)
    rh_ref: (1, C, 128)   columns [(j+1)*tT, ...+128)  (clamped on the last tile)
    w1_ref: (K, C, C)     dilated-conv weights, w1_ref[k] = W_k (Cout, Cin)
    w2_ref: (C, C)        stack-tail 1x1
    ws_ref: (C, C)        skip 1x1
    b1_ref: (C, 1) f32    conv bias
    b2_ref: (C, 1) f32    b2 + bs (combined tail+skip bias)
    out_ref:(1, C, tT)
    """
    C = out_ref.shape[1]
    tT = out_ref.shape[2]
    HW = lh_ref.shape[2]  # 128

    j = pl.program_id(1)
    is_first = j == 0
    is_last = j == pl.num_programs(1) - 1

    x_raw = xm_ref[0]                                   # (C, tT) f32
    a_m = _leaky(x_raw).astype(cdt)
    a_l = _leaky(lh_ref[0]).astype(cdt)                 # (C, 128)
    a_r = _leaky(rh_ref[0]).astype(cdt)                 # (C, 128)

    # ---- left boundary (first tile): reflect around t=0 -> col -i := x[i].
    col_h = lax.broadcasted_iota(jnp.int32, (1, HW), 1)
    for i in range(1, pad + 1):
        repl = jnp.where(is_first, a_m[:, i:i + 1], a_l[:, HW - i:HW - i + 1])
        a_l = jnp.where(col_h == HW - i, repl, a_l)

    # ---- right boundary (tile holding column T-1): reflect around T-1,
    #      local dst col t_last+i := local src col t_last-i (all static).
    col_m = None
    for i in range(1, pad + 1):
        s = t_last - i
        src = a_m[:, s:s + 1] if s >= 0 else a_l[:, HW + s:HW + s + 1]
        d = t_last + i
        if d < tT:
            # fix lands inside the main tile (only when T % tT != 0).
            repl = jnp.where(is_last, src, a_m[:, d:d + 1])
            if col_m is None:
                col_m = lax.broadcasted_iota(jnp.int32, (1, tT), 1)
            a_m = jnp.where(col_m == d, repl, a_m)
        else:
            dr = d - tT
            repl = jnp.where(is_last, src, a_r[:, dr:dr + 1])
            a_r = jnp.where(col_h == dr, repl, a_r)

    # ---- lane-aligned window: win[:, p] == act(x[j*tT - 128 + p]).
    win = jnp.concatenate([a_l, a_m, a_r], axis=-1)     # (C, HW + tT + HW)
    W = win.shape[-1]

    # ---- dilated K-tap conv as K small MXU matmuls over rolled taps.
    y = None
    for k in range(K):
        off = HW + k * dilation - pad                   # window col of local t=0
        if off == HW:
            tap = a_m                                   # aligned tap, no copy
        else:
            tap = pltpu.roll(win, shift=W - off, axis=1)[:, :tT]
        part = jnp.dot(w1_ref[k], tap, preferred_element_type=jnp.float32)
        y = part if y is None else y + part
    y = _leaky(y + b1_ref[...])                         # (C, tT) f32

    # ---- tail 1x1 + skip 1x1, split (no (2C, tT) concat), combined bias.
    out = jnp.dot(w2_ref[...], y.astype(cdt), preferred_element_type=jnp.float32)
    out = out + jnp.dot(ws_ref[...], x_raw.astype(cdt),
                        preferred_element_type=jnp.float32)
    out = out + b2_ref[...]
    out_ref[0] = out.astype(out_ref.dtype)


def residual_advanced_stack(c_nct, params, *, kernel_size=3, dilation=1,
                            tile_t=None, mxu_dtype=jnp.bfloat16):
    """c_nct: (B, C, T) float32 (PyTorch NCT convention). Returns (B, C, T)."""
    if isinstance(dilation, (list, tuple)):
        # TODO(synk): multi-dilation stack (use_multi_dilations=True) not implemented.
        raise NotImplementedError("multi-dilation stack not implemented")
    B, C, T = c_nct.shape
    K = kernel_size
    assert (K - 1) % 2 == 0, "even kernel sizes not supported"
    pad = (K - 1) // 2 * dilation
    assert 1 <= pad < LANE and T > pad

    x = c_nct
    T_out = T
    Tk = T
    if T < LANE:  # tiny-input fallback: pad up to one 128-lane tile (negligible copy).
        x = jnp.pad(x, ((0, 0), (0, 0), (0, LANE - T)))
        Tk = LANE

    # ---- T-tile selection (lane axis): biggest tile that fits, v7x-safe cap. ----
    nblk = pl.cdiv(Tk, LANE)
    if tile_t is not None:
        assert tile_t % LANE == 0 and tile_t > 0
        tblk = min(tile_t // LANE, nblk)
    else:
        max_tblk = 8192 // LANE                     # ~14 MB f32 footprint, fits v7x
        n_target = pl.cdiv(nblk, max_tblk)
        if B == 1 and n_target == 1 and nblk >= 2:
            n_target = 2                            # keep both v7x TensorCores fed
        tblk = pl.cdiv(nblk, n_target)
    tT = tblk * LANE
    n_t = pl.cdiv(Tk, tT)
    # Corner case (pad > 1 only): right-edge reflection must stay inside the
    # tile holding column T-1; fall back to a single tile otherwise.
    if n_t > 1 and (T_out % tT) != 0 and (T_out % tT) < pad:
        tblk = nblk
        tT = tblk * LANE
        n_t = 1
    t_last = (T_out - 1) % tT                       # static local index of col T-1
    last_blk = nblk - 1

    # ---- weights: channels-on-sublanes matmul layouts (tiny, cast to MXU dtype). ----
    cdt = jnp.dtype(mxu_dtype)
    w1s = jnp.transpose(params["w1"], (2, 0, 1)).astype(cdt)   # (K, Cout, Cin)
    w2 = params["w2"][:, :, 0].astype(cdt)                     # (C, C)
    ws = params["ws"][:, :, 0].astype(cdt)                     # (C, C)
    b1 = params["b1"].reshape(C, 1).astype(jnp.float32)
    b2s = (params["b2"] + params["bs"]).reshape(C, 1).astype(jnp.float32)

    # ---- VMEM budget from the chosen tile size. ----
    cbytes = cdt.itemsize
    io = 2 * (C * tT * 4 + 2 * C * LANE * 4 + C * tT * 4)       # double-buffered I/O
    tmp = (C * (tT + 2 * LANE) * cbytes                         # window
           + (K - 1) * C * tT * cbytes                          # rolled taps
           + C * tT * cbytes                                    # a_m
           + 4 * C * tT * 4                                     # y / dot partials / out
           + 2 * C * tT * cbytes)                               # y_c / x_c
    vmem_limit = int(min(max(int(1.4 * (io + tmp)), 16 << 20), 40 << 20))

    flops = 2 * B * T_out * C * C * (K + 2)
    bytes_accessed = 2 * B * C * T_out * 4 + (K + 2) * C * C * 4
    cost = pl.CostEstimate(flops=flops, transcendentals=0,
                           bytes_accessed=int(bytes_accessed))

    kernel = functools.partial(_residual_stack_kernel, K=K, dilation=dilation,
                               pad=pad, t_last=t_last, cdt=cdt)

    out = pl.pallas_call(
        kernel,
        out_shape=jax.ShapeDtypeStruct((B, C, Tk), c_nct.dtype),
        grid_spec=pltpu.PrefetchScalarGridSpec(
            num_scalar_prefetch=0,
            grid=(B, n_t),
            in_specs=[
                # main tile
                pl.BlockSpec((1, C, tT), lambda b, j: (b, 0, j)),
                # lane-aligned left halo (same HBM buffer, clamped block index)
                pl.BlockSpec((1, C, LANE),
                             lambda b, j: (b, 0, jnp.maximum(j * tblk - 1, 0))),
                # lane-aligned right halo
                pl.BlockSpec((1, C, LANE),
                             lambda b, j: (b, 0, jnp.minimum((j + 1) * tblk,
                                                             last_blk))),
                pl.BlockSpec((K, C, C), lambda b, j: (0, 0, 0)),
                pl.BlockSpec((C, C), lambda b, j: (0, 0)),
                pl.BlockSpec((C, C), lambda b, j: (0, 0)),
                pl.BlockSpec((C, 1), lambda b, j: (0, 0)),
                pl.BlockSpec((C, 1), lambda b, j: (0, 0)),
            ],
            out_specs=pl.BlockSpec((1, C, tT), lambda b, j: (b, 0, j)),
        ),
        compiler_params=pltpu.CompilerParams(
            dimension_semantics=("parallel", "parallel"),
            vmem_limit_bytes=vmem_limit),
        cost_estimate=cost,
    )(x, x, x, w1s, w2, ws, b1, b2s)

    return out if Tk == T_out else out[:, :, :T_out]


def _reference(c_nct, params, *, kernel_size=3, dilation=1):
    """Pure-JAX reference mirroring the PyTorch forward (NCT layout)."""
    pad = (kernel_size - 1) // 2 * dilation
    y = jnp.where(c_nct >= 0, c_nct, NEG_SLOPE * c_nct)
    y = jnp.pad(y, ((0, 0), (0, 0), (pad, pad)), mode="reflect")
    dn = lax.conv_dimension_numbers(y.shape, params["w1"].shape,
                                    ("NCH", "OIH", "NCH"))
    y = lax.conv_general_dilated(y, params["w1"], (1,), "VALID",
                                 rhs_dilation=(dilation,),
                                 dimension_numbers=dn)
    y = y + params["b1"][None, :, None]
    y = jnp.where(y >= 0, y, NEG_SLOPE * y)
    y = lax.conv_general_dilated(y, params["w2"], (1,), "VALID",
                                 dimension_numbers=dn)
    y = y + params["b2"][None, :, None]
    org = lax.conv_general_dilated(c_nct, params["ws"], (1,), "VALID",
                                   dimension_numbers=dn)
    org = org + params["bs"][None, :, None]
    return y + org


if __name__ == "__main__":
    C, K = 32, 3
    key = jax.random.PRNGKey(0)
    keys = jax.random.split(key, 10)
    scale = 0.1
    params = {
        "w1": scale * jax.random.normal(keys[0], (C, C, K), jnp.float32),
        "b1": scale * jax.random.normal(keys[1], (C,), jnp.float32),
        "w2": scale * jax.random.normal(keys[2], (C, C, 1), jnp.float32),
        "b2": scale * jax.random.normal(keys[3], (C,), jnp.float32),
        "ws": scale * jax.random.normal(keys[4], (C, C, 1), jnp.float32),
        "bs": scale * jax.random.normal(keys[5], (C,), jnp.float32),
    }

    def check(c, out, tol):
        ref = _reference(c, params, kernel_size=K, dilation=1)
        assert out.shape == c.shape
        err = float(jnp.max(jnp.abs(out - ref)))
        assert err < tol, err

    # Case 1: multi-tile, T multiple of 128, bit-accurate f32 MXU path
    # (exercises cross-tile halos and both boundary tiles).
    B, T = 2, 512
    c = jax.random.normal(keys[6], (B, C, T), jnp.float32)
    out = jax.block_until_ready(
        residual_advanced_stack(c, params, tile_t=128, mxu_dtype=jnp.float32))
    check(c, out, 5e-4)

    # Case 2: ragged T (not a multiple of 128) -> masked output edge + in-tile
    # right-reflection fixup, f32 path.
    T2 = 392
    c2 = jax.random.normal(keys[7], (B, C, T2), jnp.float32)
    out2 = jax.block_until_ready(
        residual_advanced_stack(c2, params, tile_t=256, mxu_dtype=jnp.float32))
    check(c2, out2, 5e-4)

    # Case 3: defaults (bf16 MXU operands, auto tile selection), B=1 so the
    # n_t >= 2 megacore forcing kicks in.  Looser tolerance for bf16 operands.
    T3 = 384
    c3 = jax.random.normal(keys[8], (1, C, T3), jnp.float32)
    out3 = jax.block_until_ready(residual_advanced_stack(c3, params))
    check(c3, out3, 3e-2)

    # Case 4: tiny T (< 128) fallback path.
    T4 = 96
    c4 = jax.random.normal(keys[9], (B, C, T4), jnp.float32)
    out4 = jax.block_until_ready(
        residual_advanced_stack(c4, params, mxu_dtype=jnp.float32))
    check(c4, out4, 5e-4)

    print("KERNEL_OK")
</pallas_src>

<mosaic_0001>
module attributes {stable_mosaic.version = 11 : i64} {
  func.func @_residual_stack_kernel(%arg0: i32, %arg1: i32, %arg2: memref<1x32x128xf32, #tpu.memory_space<vmem>>, %arg3: memref<1x32x128xf32, #tpu.memory_space<vmem>>, %arg4: memref<1x32x128xf32, #tpu.memory_space<vmem>>, %arg5: memref<3x32x32xf32, #tpu.memory_space<vmem>>, %arg6: memref<32x32xf32, #tpu.memory_space<vmem>>, %arg7: memref<32x32xf32, #tpu.memory_space<vmem>>, %arg8: memref<32x1xf32, #tpu.memory_space<vmem>>, %arg9: memref<32x1xf32, #tpu.memory_space<vmem>>, %arg10: memref<1x32x128xf32, #tpu.memory_space<vmem>>) attributes {dimension_semantics = [#tpu.dimension_semantics<parallel>, #tpu.dimension_semantics<parallel>], iteration_bounds = array<i64: 2, 4>, scalar_prefetch = 0 : i64, scratch_operands = 0 : i64, tpu.core_type = #tpu.core_type<tc>, window_params = [{transform_indices = @transform_0, window_bounds = array<i64: 1, 32, 128>}, {transform_indices = @transform_1, window_bounds = array<i64: 1, 32, 128>}, {transform_indices = @transform_2, window_bounds = array<i64: 1, 32, 128>}, {pipeline_mode = #tpu.pipeline_mode<synchronous>, transform_indices = @transform_3, window_bounds = array<i64: 3, 32, 32>}, {pipeline_mode = #tpu.pipeline_mode<synchronous>, transform_indices = @transform_4, window_bounds = array<i64: 32, 32>}, {pipeline_mode = #tpu.pipeline_mode<synchronous>, transform_indices = @transform_5, window_bounds = array<i64: 32, 32>}, {pipeline_mode = #tpu.pipeline_mode<synchronous>, transform_indices = @transform_6, window_bounds = array<i64: 32, 1>}, {pipeline_mode = #tpu.pipeline_mode<synchronous>, transform_indices = @transform_7, window_bounds = array<i64: 32, 1>}, {transform_indices = @transform_8, window_bounds = array<i64: 1, 32, 128>}]} {
    %c0_i32 = arith.constant 0 : i32
    %0 = arith.cmpi eq, %arg1, %c0_i32 : i32
    %c3_i32 = arith.constant 3 : i32
    %1 = arith.cmpi eq, %arg1, %c3_i32 : i32
    %c0 = arith.constant 0 : index
    %c0_0 = arith.constant 0 : index
    %c0_1 = arith.constant 0 : index
    %2 = vector.load %arg2[%c0, %c0_0, %c0_1] : memref<1x32x128xf32, #tpu.memory_space<vmem>>, vector<1x32x128xf32>
    %3 = vector.shape_cast %2 : vector<1x32x128xf32> to vector<32x128xf32>
    %cst = arith.constant 2.000000e-01 : f32
    %4 = vector.broadcast %cst : f32 to vector<32x128xf32>
    %5 = arith.mulf %4, %3 : vector<32x128xf32>
    %6 = arith.maximumf %3, %5 : vector<32x128xf32>
    %c0_2 = arith.constant 0 : index
    %c0_3 = arith.constant 0 : index
    %c0_4 = arith.constant 0 : index
    %7 = vector.load %arg3[%c0_2, %c0_3, %c0_4] : memref<1x32x128xf32, #tpu.memory_space<vmem>>, vector<1x32x128xf32>
    %8 = vector.shape_cast %7 : vector<1x32x128xf32> to vector<32x128xf32>
    %cst_5 = arith.constant 2.000000e-01 : f32
    %9 = vector.broadcast %cst_5 : f32 to vector<32x128xf32>
    %10 = arith.mulf %9, %8 : vector<32x128xf32>
    %11 = arith.maximumf %8, %10 : vector<32x128xf32>
    %c0_6 = arith.constant 0 : index
    %c0_7 = arith.constant 0 : index
    %c0_8 = arith.constant 0 : index
    %12 = vector.load %arg4[%c0_6, %c0_7, %c0_8] : memref<1x32x128xf32, #tpu.memory_space<vmem>>, vector<1x32x128xf32>
    %13 = vector.shape_cast %12 : vector<1x32x128xf32> to vector<32x128xf32>
    %cst_9 = arith.constant 2.000000e-01 : f32
    %14 = vector.broadcast %cst_9 : f32 to vector<32x128xf32>
    %15 = arith.mulf %14, %13 : vector<32x128xf32>
    %16 = arith.maximumf %13, %15 : vector<32x128xf32>
    %17 = tpu.iota {dimensions = array<i32: 1>} : vector<1x128xi32>
    %18 = vector.extract_strided_slice %6 {offsets = [0, 1], sizes = [32, 1], strides = [1, 1]} : vector<32x128xf32> to vector<32x1xf32>
    %19 = vector.extract_strided_slice %11 {offsets = [0, 127], sizes = [32, 1], strides = [1, 1]} : vector<32x128xf32> to vector<32x1xf32>
    %20 = arith.select %0, %18, %19 : vector<32x1xf32>
    %c127_i32 = arith.constant 127 : i32
    %21 = vector.broadcast %c127_i32 : i32 to vector<1x128xi32>
    %22 = arith.cmpi eq, %17, %21 : vector<1x128xi32>
    %23 = vector.shape_cast %22 : vector<1x128xi1> to vector<1x128xi1>
    %24 = vector.broadcast %23 : vector<1x128xi1> to vector<32x128xi1>
    %25 = vector.shape_cast %20 : vector<32x1xf32> to vector<32x1xf32>
    %26 = vector.broadcast %25 : vector<32x1xf32> to vector<32x128xf32>
    %27 = arith.select %24, %26, %11 : vector<32x128xi1>, vector<32x128xf32>
    %28 = vector.extract_strided_slice %6 {offsets = [0, 126], sizes = [32, 1], strides = [1, 1]} : vector<32x128xf32> to vector<32x1xf32>
    %29 = vector.extract_strided_slice %16 {offsets = [0, 0], sizes = [32, 1], strides = [1, 1]} : vector<32x128xf32> to vector<32x1xf32>
    %30 = arith.select %1, %28, %29 : vector<32x1xf32>
    %c0_i32_10 = arith.constant 0 : i32
    %31 = vector.broadcast %c0_i32_10 : i32 to vector<1x128xi32>
    %32 = arith.cmpi eq, %17, %31 : vector<1x128xi32>
    %33 = vector.shape_cast %32 : vector<1x128xi1> to vector<1x128xi1>
    %34 = vector.broadcast %33 : vector<1x128xi1> to vector<32x128xi1>
    %35 = vector.shape_cast %30 : vector<32x1xf32> to vector<32x1xf32>
    %36 = vector.broadcast %35 : vector<32x1xf32> to vector<32x128xf32>
    %37 = arith.select %34, %36, %16 : vector<32x128xi1>, vector<32x128xf32>
    %38 = tpu.concatenate %27, %6, %37 in 1 : vector<32x128xf32>, vector<32x128xf32>, vector<32x128xf32> -> vector<32x384xf32>
    %c257_i32 = arith.constant 257 : i32
    %39 = tpu.dynamic_rotate %38 by %c257_i32 dim 1 : vector<32x384xf32>, i32 -> vector<32x384xf32>
    %40 = vector.extract_strided_slice %39 {offsets = [0, 0], sizes = [32, 128], strides = [1, 1]} : vector<32x384xf32> to vector<32x128xf32>
    %c0_11 = arith.constant 0 : index
    %c0_12 = arith.constant 0 : index
    %c0_13 = arith.constant 0 : index
    %41 = vector.load %arg5[%c0_11, %c0_12, %c0_13] : memref<3x32x32xf32, #tpu.memory_space<vmem>>, vector<1x32x32xf32>
    %42 = vector.shape_cast %41 : vector<1x32x32xf32> to vector<32x32xf32>
    %cst_14 = arith.constant dense<0.000000e+00> : vector<32x128xf32>
    %43 = tpu.matmul %42, %40, %cst_14 {dimension_numbers = #tpu.dot_dimension_numbers<[1], [0], [0], [1], [0, 0, 1, 1], [], []>} : vector<32x32xf32>, vector<32x128xf32>, vector<32x128xf32> -> vector<32x128xf32>
    %c1 = arith.constant 1 : index
    %c0_15 = arith.constant 0 : index
    %c0_16 = arith.constant 0 : index
    %44 = vector.load %arg5[%c1, %c0_15, %c0_16] : memref<3x32x32xf32, #tpu.memory_space<vmem>>, vector<1x32x32xf32>
    %45 = vector.shape_cast %44 : vector<1x32x32xf32> to vector<32x32xf32>
    %cst_17 = arith.constant dense<0.000000e+00> : vector<32x128xf32>
    %46 = tpu.matmul %45, %6, %cst_17 {dimension_numbers = #tpu.dot_dimension_numbers<[1], [0], [0], [1], [0, 0, 1, 1], [], []>} : vector<32x32xf32>, vector<32x128xf32>, vector<32x128xf32> -> vector<32x128xf32>
    %47 = arith.addf %43, %46 : vector<32x128xf32>
    %c255_i32 = arith.constant 255 : i32
    %48 = tpu.dynamic_rotate %38 by %c255_i32 dim 1 : vector<32x384xf32>, i32 -> vector<32x384xf32>
    %49 = vector.extract_strided_slice %48 {offsets = [0, 0], sizes = [32, 128], strides = [1, 1]} : vector<32x384xf32> to vector<32x128xf32>
    %c2 = arith.constant 2 : index
    %c0_18 = arith.constant 0 : index
    %c0_19 = arith.constant 0 : index
    %50 = vector.load %arg5[%c2, %c0_18, %c0_19] : memref<3x32x32xf32, #tpu.memory_space<vmem>>, vector<1x32x32xf32>
    %51 = vector.shape_cast %50 : vector<1x32x32xf32> to vector<32x32xf32>
    %cst_20 = arith.constant dense<0.000000e+00> : vector<32x128xf32>
    %52 = tpu.matmul %51, %49, %cst_20 {dimension_numbers = #tpu.dot_dimension_numbers<[1], [0], [0], [1], [0, 0, 1, 1], [], []>} : vector<32x32xf32>, vector<32x128xf32>, vector<32x128xf32> -> vector<32x128xf32>
    %53 = arith.addf %47, %52 : vector<32x128xf32>
    %c0_21 = arith.constant 0 : index
    %c0_22 = arith.constant 0 : index
    %54 = vector.load %arg8[%c0_21, %c0_22] : memref<32x1xf32, #tpu.memory_space<vmem>>, vector<32x1xf32>
    %55 = vector.broadcast %54 : vector<32x1xf32> to vector<32x128xf32>
    %56 = arith.addf %53, %55 : vector<32x128xf32>
    %cst_23 = arith.constant 2.000000e-01 : f32
    %57 = vector.broadcast %cst_23 : f32 to vector<32x128xf32>
    %58 = arith.mulf %57, %56 : vector<32x128xf32>
    %59 = arith.maximumf %56, %58 : vector<32x128xf32>
    %c0_24 = arith.constant 0 : index
    %c0_25 = arith.constant 0 : index
    %60 = vector.load %arg6[%c0_24, %c0_25] : memref<32x32xf32, #tpu.memory_space<vmem>>, vector<32x32xf32>
    %cst_26 = arith.constant dense<0.000000e+00> : vector<32x128xf32>
    %61 = tpu.matmul %60, %59, %cst_26 {dimension_numbers = #tpu.dot_dimension_numbers<[1], [0], [0], [1], [0, 0, 1, 1], [], []>} : vector<32x32xf32>, vector<32x128xf32>, vector<32x128xf32> -> vector<32x128xf32>
    %c0_27 = arith.constant 0 : index
    %c0_28 = arith.constant 0 : index
    %62 = vector.load %arg7[%c0_27, %c0_28] : memref<32x32xf32, #tpu.memory_space<vmem>>, vector<32x32xf32>
    %cst_29 = arith.constant dense<0.000000e+00> : vector<32x128xf32>
    %63 = tpu.matmul %62, %3, %cst_29 {dimension_numbers = #tpu.dot_dimension_numbers<[1], [0], [0], [1], [0, 0, 1, 1], [], []>} : vector<32x32xf32>, vector<32x128xf32>, vector<32x128xf32> -> vector<32x128xf32>
    %64 = arith.addf %61, %63 : vector<32x128xf32>
    %c0_30 = arith.constant 0 : index
    %c0_31 = arith.constant 0 : index
    %65 = vector.load %arg9[%c0_30, %c0_31] : memref<32x1xf32, #tpu.memory_space<vmem>>, vector<32x1xf32>
    %66 = vector.broadcast %65 : vector<32x1xf32> to vector<32x128xf32>
    %67 = arith.addf %64, %66 : vector<32x128xf32>
    %c0_32 = arith.constant 0 : index
    %c0_33 = arith.constant 0 : index
    %c0_34 = arith.constant 0 : index
    %68 = vector.load %arg10[%c0_32, %c0_33, %c0_34] : memref<1x32x128xf32, #tpu.memory_space<vmem>>, vector<1x32x128xf32>
    %69 = vector.shape_cast %68 : vector<1x32x128xf32> to vector<32x128xf32>
    %70 = vector.shape_cast %67 : vector<32x128xf32> to vector<1x32x128xf32>
    tpu.vector_store %arg10[%c0_32, %c0_33, %c0_34], %70 {strides = array<i32>} : memref<1x32x128xf32, #tpu.memory_space<vmem>>, vector<1x32x128xf32>,
    return
  }
  func.func @transform_0(%arg0: i32, %arg1: i32) -> (i32, i32, i32) {
    %c0_i32 = arith.constant 0 : i32
    %c0_i32_0 = arith.constant 0 : i32
    return %arg0, %c0_i32, %arg1 : i32, i32, i32
  }
  func.func @transform_1(%arg0: i32, %arg1: i32) -> (i32, i32, i32) {
    %c1_i32 = arith.constant 1 : i32
    %0 = arith.muli %arg1, %c1_i32 : i32
    %c1_i32_0 = arith.constant 1 : i32
    %1 = arith.subi %0, %c1_i32_0 : i32
    %c0_i32 = arith.constant 0 : i32
    %2 = arith.maxsi %1, %c0_i32 : i32
    %c0_i32_1 = arith.constant 0 : i32
    %c0_i32_2 = arith.constant 0 : i32
    return %arg0, %c0_i32_1, %2 : i32, i32, i32
  }
  func.func @transform_2(%arg0: i32, %arg1: i32) -> (i32, i32, i32) {
    %c1_i32 = arith.constant 1 : i32
    %0 = arith.addi %arg1, %c1_i32 : i32
    %c1_i32_0 = arith.constant 1 : i32
    %1 = arith.muli %0, %c1_i32_0 : i32
    %c3_i32 = arith.constant 3 : i32
    %2 = arith.minsi %1, %c3_i32 : i32
    %c0_i32 = arith.constant 0 : i32
    %c0_i32_1 = arith.constant 0 : i32
    return %arg0, %c0_i32, %2 : i32, i32, i32
  }
  func.func @transform_3(%arg0: i32, %arg1: i32) -> (i32, i32, i32) {
    %c0_i32 = arith.constant 0 : i32
    %c0_i32_0 = arith.constant 0 : i32
    %c0_i32_1 = arith.constant 0 : i32
    %c0_i32_2 = arith.constant 0 : i32
    return %c0_i32, %c0_i32_0, %c0_i32_1 : i32, i32, i32
  }
  func.func @transform_4(%arg0: i32, %arg1: i32) -> (i32, i32) {
    %c0_i32 = arith.constant 0 : i32
    %c0_i32_0 = arith.constant 0 : i32
    %c0_i32_1 = arith.constant 0 : i32
    return %c0_i32, %c0_i32_0 : i32, i32
  }
  func.func @transform_5(%arg0: i32, %arg1: i32) -> (i32, i32) {
    %c0_i32 = arith.constant 0 : i32
    %c0_i32_0 = arith.constant 0 : i32
    %c0_i32_1 = arith.constant 0 : i32
    return %c0_i32, %c0_i32_0 : i32, i32
  }
  func.func @transform_6(%arg0: i32, %arg1: i32) -> (i32, i32) {
    %c0_i32 = arith.constant 0 : i32
    %c0_i32_0 = arith.constant 0 : i32
    %c0_i32_1 = arith.constant 0 : i32
    return %c0_i32, %c0_i32_0 : i32, i32
  }
  func.func @transform_7(%arg0: i32, %arg1: i32) -> (i32, i32) {
    %c0_i32 = arith.constant 0 : i32
    %c0_i32_0 = arith.constant 0 : i32
    %c0_i32_1 = arith.constant 0 : i32
    return %c0_i32, %c0_i32_0 : i32, i32
  }
  func.func @transform_8(%arg0: i32, %arg1: i32) -> (i32, i32, i32) {
    %c0_i32 = arith.constant 0 : i32
    %c0_i32_0 = arith.constant 0 : i32
    return %arg0, %c0_i32, %arg1 : i32, i32, i32
  }
}

</mosaic_0001>

<llo_original>
// kernel: tpu_custom_call.1
$region0: #{tpu_custom_call.1}
  #allocation0 [shape = 'u32[]', space=smem, size = 0x4, offset = 0x4, fixed_abs, tag = 'smem constant byte address 0x4 - core index']
  #allocation1 [shape = 'u32[72,128]{1,0:T(1,128)}', space=vmem, size = 0x9000, scoped, tag = 'internal scratch']
  %s0 = inlined_call_operand.hbm [shape: f32[2,32,512], index: 0, kind: input, shape index: {}]
  %s1 = inlined_call_operand.hbm [shape: f32[2,32,512], index: 1, kind: input, shape index: {}]
  %s2 = inlined_call_operand.hbm [shape: f32[2,32,512], index: 2, kind: input, shape index: {}]
  %s3 = inlined_call_operand.hbm [shape: f32[3,32,32], index: 3, kind: input, shape index: {}]
  %s4 = inlined_call_operand.vmem [shape: f32[32,32], index: 4, kind: input, shape index: {}]
  %s5 = inlined_call_operand.vmem [shape: f32[32,32], index: 5, kind: input, shape index: {}]
  %s6 = inlined_call_operand.vmem [shape: f32[32,1], index: 6, kind: input, shape index: {}]
  %s7 = inlined_call_operand.vmem [shape: f32[32,1], index: 7, kind: input, shape index: {}]
  %s8 = inlined_call_operand.hbm [shape: f32[2,32,512], index: 8, kind: output, shape index: {}]
  %s9 = sld [smem:[#allocation0]]
  $region81: #{tpu_custom_call.1} parent=0
    _
  %s11 = ssub.s32 1, %s9
  %s12 = scalar_select 0, %s11, %s9
  $region1: #{tpu_custom_call.1} parent=0
    #allocation2 [shape = 'u8[32768]{0}', space=vmem, size = 0x8000, scoped, tag = 'input window, operand 0']
    #allocation3 [shape = 's32[2]{0}', space=sflag, size = 0x8, scoped, tag = 'scoped memory for tpu_custom_call.1']
    #allocation4 [shape = 's32[2]{0}', space=sflag, size = 0x8, scoped, tag = 'scoped memory for tpu_custom_call.1']
    #allocation5 [shape = 'u8[32768]{0}', space=vmem, size = 0x8000, scoped, tag = 'input window, operand 1']
    #allocation6 [shape = 's32[2]{0}', space=sflag, size = 0x8, scoped, tag = 'scoped memory for tpu_custom_call.1']
    #allocation7 [shape = 'u8[32768]{0}', space=vmem, size = 0x8000, scoped, tag = 'input window, operand 2']
    #allocation8 [shape = 'u8[49152]{0}', space=vmem, size = 0xc000, scoped, tag = 'input window, operand 3, single buffered']
    #allocation9 [shape = 's32[1]{0}', space=sflag, size = 0x4, scoped, tag = 'scoped memory for tpu_custom_call.1']
    #allocation10 [shape = 'u8[32768]{0}', space=vmem, size = 0x8000, scoped, tag = 'output window, operand 0']
    %13 = vsyncpa [#allocation3], 0
    %s14 = scalar_lea.sflag [#allocation3], 1
    %15 = vsyncpa %s14, 0
    %16 = vsyncpa [#allocation6], 0
    %s17 = scalar_lea.sflag [#allocation6], 1
    %18 = vsyncpa %s17, 0
    %19 = vsyncpa [#allocation9], 0
    %20 = vsyncpa [#allocation4], 0
    %s21 = scalar_lea.sflag [#allocation4], 1
    %22 = vsyncpa %s21, 0
    loop: start=0, step=1, limit=10
    $region2: #{tpu_custom_call.1} parent=1 // loop_pre_header
      _
    $region3: #{tpu_custom_call.1} parent=1 // loop_header
      %s24 = sphi 0, %s28
      %p25 = scmp.ge.s32.totalorder %s24, 10
      %s31 = sphi 0, %s43
      %s32 = sphi 0, %s39
      %s33 = sphi 0, %s31
      %s34 = sphi 0, %s32
      %s35 = sphi 0, %s33
      %s36 = sphi 0, %s34
      %s48 = sphi 0, %s50
      %s51 = sphi 0, %s48
      %s52 = sphi 0, %s51
      %s68 = sphi 0, %s52
      %s82 = sphi 0, %s84
      %s85 = sphi 0, %s82
      %s86 = sphi 0, %s85
      %s102 = sphi 0, %s86
      %s116 = sphi 0, %s118
      %s119 = sphi 0, %s116
      %s120 = sphi 0, %s119
      %s136 = sphi 0, %s120
      %s140 = sphi 0, %s140
      %s142 = sphi 0, %s140
      %s143 = sphi 0, %s142
      %s157 = sphi 0, %s143
      %s161 = sphi 0, %s161
      %s163 = sphi 0, %s161
      %s164 = sphi 0, %s163
      %s178 = sphi 0, %s164
      %s182 = sphi 0, %s182
      %s184 = sphi 0, %s182
      %s185 = sphi 0, %s184
      %s199 = sphi 0, %s185
      %s203 = sphi 0, %s203
      %s205 = sphi 0, %s203
      %s206 = sphi 0, %s205
      %s220 = sphi 0, %s206
      %s224 = sphi 0, %s224
      %s226 = sphi 0, %s224
      %s227 = sphi 0, %s226
      %s241 = sphi 0, %s227
      %s249 = sphi 0, %s251
      %s252 = sphi 0, %s249
      %s253 = sphi 0, %s252
      %s269 = sphi 0, %s253
    $region4: #{tpu_custom_call.1} parent=1 // loop_header_branch
      %27 = sbr.rel (%p25) target = $region8
    $region5: #{tpu_custom_call.1} parent=1 // loop_body
      %s29 = ssub.s32 %s24, 1
      %s30 = ssub.s32 %s24, 2
      %s37 = sadd.s32 1, %s32
      %p38 = scmp.ge.s32.totalorder %s37, 4
      %s39 = scalar_select %p38, 0, %s37
      %s40 = sadd.s32 1, %s31
      %s41 = scalar_select %p38, %s40, %s31
      %p42 = scmp.ge.s32.totalorder %s41, 2
      %s43 = scalar_select %p42, 0, %s41
      %s44 = ssub.s32 %s31, %s43
      %s45 = ssub.s32 %s32, %s39
      %s46 = sor.u32 %s44, %s45
      %p47 = scmp.eq.s32.totalorder %s46, 0
      %s49 = sadd.s32 %s48, 1
      %s50 = scalar_select %p47, %s48, %s49
      %p53 = pneg %p47
      %p54 = scmp.eq.s32.totalorder %s24, 7
      %p55 = por %p53, %p54
      %p56 = scmp.ne.s32.totalorder %s48, %s51
      %p57 = scmp.eq.s32.totalorder %s24, 0
      %p58 = por %p56, %p57
      %p59 = scmp.ne.s32.totalorder %s48, %s51
      %p60 = scmp.eq.s32.totalorder %s29, 7
      %p61 = por %p59, %p60
      %p62 = scmp.ne.s32.totalorder %s51, %s52
      %p63 = scmp.eq.s32.totalorder %s29, 0
      %p64 = por %p62, %p63
      %p65 = scmp.ne.s32.totalorder %s51, %s52
      %p66 = scmp.eq.s32.totalorder %s30, 7
      %p67 = por %p65, %p66
      %p69 = scmp.ne.s32.totalorder %s52, %s68
      %p70 = scmp.eq.s32.totalorder %s30, 0
      %p71 = por %p69, %p70
      %s72 = ssub.s32 %s32, 1
      %p73 = scmp.gt.s32.totalorder %s72, 0
      %s74 = scalar_select %p73, %s72, 0
      %s75 = ssub.s32 %s39, 1
      %p76 = scmp.gt.s32.totalorder %s75, 0
      %s77 = scalar_select %p76, %s75, 0
      %s78 = ssub.s32 %s31, %s43
      %s79 = ssub.s32 %s74, %s77
      %s80 = sor.u32 %s78, %s79
      %p81 = scmp.eq.s32.totalorder %s80, 0
      %s83 = sadd.s32 %s82, 1
      %s84 = scalar_select %p81, %s82, %s83
      %p87 = pneg %p81
      %p88 = scmp.eq.s32.totalorder %s24, 7
      %p89 = por %p87, %p88
      %p90 = scmp.ne.s32.totalorder %s82, %s85
      %p91 = scmp.eq.s32.totalorder %s24, 0
      %p92 = por %p90, %p91
      %p93 = scmp.ne.s32.totalorder %s82, %s85
      %p94 = scmp.eq.s32.totalorder %s29, 7
      %p95 = por %p93, %p94
      %p96 = scmp.ne.s32.totalorder %s85, %s86
      %p97 = scmp.eq.s32.totalorder %s29, 0
      %p98 = por %p96, %p97
      %p99 = scmp.ne.s32.totalorder %s85, %s86
      %p100 = scmp.eq.s32.totalorder %s30, 7
      %p101 = por %p99, %p100
      %p103 = scmp.ne.s32.totalorder %s86, %s102
      %p104 = scmp.eq.s32.totalorder %s30, 0
      %p105 = por %p103, %p104
      %s106 = sadd.s32 %s32, 1
      %p107 = scmp.lt.s32.totalorder %s106, 3
      %s108 = scalar_select %p107, %s106, 3
      %s109 = sadd.s32 %s39, 1
      %p110 = scmp.lt.s32.totalorder %s109, 3
      %s111 = scalar_select %p110, %s109, 3
      %s112 = ssub.s32 %s31, %s43
      %s113 = ssub.s32 %s108, %s111
      %s114 = sor.u32 %s112, %s113
      %p115 = scmp.eq.s32.totalorder %s114, 0
      %s117 = sadd.s32 %s116, 1
      %s118 = scalar_select %p115, %s116, %s117
      %p121 = pneg %p115
      %p122 = scmp.eq.s32.totalorder %s24, 7
      %p123 = por %p121, %p122
      %p124 = scmp.ne.s32.totalorder %s116, %s119
      %p125 = scmp.eq.s32.totalorder %s24, 0
      %p126 = por %p124, %p125
      %p127 = scmp.ne.s32.totalorder %s116, %s119
      %p128 = scmp.eq.s32.totalorder %s29, 7
      %p129 = por %p127, %p128
      %p130 = scmp.ne.s32.totalorder %s119, %s120
      %p131 = scmp.eq.s32.totalorder %s29, 0
      %p132 = por %p130, %p131
      %p133 = scmp.ne.s32.totalorder %s119, %s120
      %p134 = scmp.eq.s32.totalorder %s30, 7
      %p135 = por %p133, %p134
      %p137 = scmp.ne.s32.totalorder %s120, %s136
      %p138 = scmp.eq.s32.totalorder %s30, 0
      %p139 = por %p137, %p138
      %s141 = sadd.s32 %s140, 1
      %p144 = scmp.eq.s32.totalorder %s24, 7
      %p145 = scmp.ne.s32.totalorder %s140, %s142
      %p146 = scmp.eq.s32.totalorder %s24, 0
      %p147 = por %p145, %p146
      %p148 = scmp.ne.s32.totalorder %s140, %s142
      %p149 = scmp.eq.s32.totalorder %s29, 7
      %p150 = por %p148, %p149
      %p151 = scmp.ne.s32.totalorder %s142, %s143
      %p152 = scmp.eq.s32.totalorder %s29, 0
      %p153 = por %p151, %p152
      %p154 = scmp.ne.s32.totalorder %s142, %s143
      %p155 = scmp.eq.s32.totalorder %s30, 7
      %p156 = por %p154, %p155
      %p158 = scmp.ne.s32.totalorder %s143, %s157
      %p159 = scmp.eq.s32.totalorder %s30, 0
      %p160 = por %p158, %p159
      %s162 = sadd.s32 %s161, 1
      %p165 = scmp.eq.s32.totalorder %s24, 7
      %p166 = scmp.ne.s32.totalorder %s161, %s163
      %p167 = scmp.eq.s32.totalorder %s24, 0
      %p168 = por %p166, %p167
      %p169 = scmp.ne.s32.totalorder %s161, %s163
      %p170 = scmp.eq.s32.totalorder %s29, 7
      %p171 = por %p169, %p170
      %p172 = scmp.ne.s32.totalorder %s163, %s164
      %p173 = scmp.eq.s32.totalorder %s29, 0
      %p174 = por %p172, %p173
      %p175 = scmp.ne.s32.totalorder %s163, %s164
      %p176 = scmp.eq.s32.totalorder %s30, 7
      %p177 = por %p175, %p176
      %p179 = scmp.ne.s32.totalorder %s164, %s178
      %p180 = scmp.eq.s32.totalorder %s30, 0
      %p181 = por %p179, %p180
      %s183 = sadd.s32 %s182, 1
      %p186 = scmp.eq.s32.totalorder %s24, 7
      %p187 = scmp.ne.s32.totalorder %s182, %s184
      %p188 = scmp.eq.s32.totalorder %s24, 0
      %p189 = por %p187, %p188
      %p190 = scmp.ne.s32.totalorder %s182, %s184
      %p191 = scmp.eq.s32.totalorder %s29, 7
      %p192 = por %p190, %p191
      %p193 = scmp.ne.s32.totalorder %s184, %s185
      %p194 = scmp.eq.s32.totalorder %s29, 0
      %p195 = por %p193, %p194
      %p196 = scmp.ne.s32.totalorder %s184, %s185
      %p197 = scmp.eq.s32.totalorder %s30, 7
      %p198 = por %p196, %p197
      %p200 = scmp.ne.s32.totalorder %s185, %s199
      %p201 = scmp.eq.s32.totalorder %s30, 0
      %p202 = por %p200, %p201
      %s204 = sadd.s32 %s203, 1
      %p207 = scmp.eq.s32.totalorder %s24, 7
      %p208 = scmp.ne.s32.totalorder %s203, %s205
      %p209 = scmp.eq.s32.totalorder %s24, 0
      %p210 = por %p208, %p209
      %p211 = scmp.ne.s32.totalorder %s203, %s205
      %p212 = scmp.eq.s32.totalorder %s29, 7
      %p213 = por %p211, %p212
      %p214 = scmp.ne.s32.totalorder %s205, %s206
      %p215 = scmp.eq.s32.totalorder %s29, 0
      %p216 = por %p214, %p215
      %p217 = scmp.ne.s32.totalorder %s205, %s206
      %p218 = scmp.eq.s32.totalorder %s30, 7
      %p219 = por %p217, %p218
      %p221 = scmp.ne.s32.totalorder %s206, %s220
      %p222 = scmp.eq.s32.totalorder %s30, 0
      %p223 = por %p221, %p222
      %s225 = sadd.s32 %s224, 1
      %p228 = scmp.eq.s32.totalorder %s24, 7
      %p229 = scmp.ne.s32.totalorder %s224, %s226
      %p230 = scmp.eq.s32.totalorder %s24, 0
      %p231 = por %p229, %p230
      %p232 = scmp.ne.s32.totalorder %s224, %s226
      %p233 = scmp.eq.s32.totalorder %s29, 7
      %p234 = por %p232, %p233
      %p235 = scmp.ne.s32.totalorder %s226, %s227
      %p236 = scmp.eq.s32.totalorder %s29, 0
      %p237 = por %p235, %p236
      %p238 = scmp.ne.s32.totalorder %s226, %s227
      %p239 = scmp.eq.s32.totalorder %s30, 7
      %p240 = por %p238, %p239
      %p242 = scmp.ne.s32.totalorder %s227, %s241
      %p243 = scmp.eq.s32.totalorder %s30, 0
      %p244 = por %p242, %p243
      %s245 = ssub.s32 %s31, %s43
      %s246 = ssub.s32 %s32, %s39
      %s247 = sor.u32 %s245, %s246
      %p248 = scmp.eq.s32.totalorder %s247, 0
      %s250 = sadd.s32 %s249, 1
      %s251 = scalar_select %p248, %s249, %s250
      %p254 = pneg %p248
      %p255 = scmp.eq.s32.totalorder %s24, 7
      %p256 = por %p254, %p255
      %p257 = scmp.ne.s32.totalorder %s249, %s252
      %p258 = scmp.eq.s32.totalorder %s24, 0
      %p259 = por %p257, %p258
      %p260 = scmp.ne.s32.totalorder %s249, %s252
      %p261 = scmp.eq.s32.totalorder %s29, 7
      %p262 = por %p260, %p261
      %p263 = scmp.ne.s32.totalorder %s252, %s253
      %p264 = scmp.eq.s32.totalorder %s29, 0
      %p265 = por %p263, %p264
      %p266 = scmp.ne.s32.totalorder %s252, %s253
      %p267 = scmp.eq.s32.totalorder %s30, 7
      %p268 = por %p266, %p267
      %p270 = scmp.ne.s32.totalorder %s253, %s269
      %p271 = scmp.eq.s32.totalorder %s30, 0
      %p272 = por %p270, %p271
      %p273 = scmp.le.s32.totalorder 1, %s24
      %p274 = scmp.lt.s32.totalorder %s24, 9
      %p275 = pnand %p273, %p274
      %p276 = pneg %p275
      // Predicated region
      $region9: #{tpu_custom_call.1} parent=5 // pred_check
        _
      $region10: #{tpu_custom_call.1} parent=5 // pred_check_branch
        %278 = sbr.rel (%p275) target = $region12
      $region11: #{tpu_custom_call.1} parent=5 // pred_region
        %s279 = ssub.s32 %s24, 1
        // Predicated region
        $region13: #{tpu_custom_call.1} parent=11 // pred_check
          %p280 = pneg %p153
        $region14: #{tpu_custom_call.1} parent=11 // pred_check_branch
          %282 = sbr.rel (%p280) target = $region16
        $region15: #{tpu_custom_call.1} parent=11 // pred_region
          %284 = vsyncadd [#allocation9], 0
          %s285 = sshll.u32 %s3, 4
          %s286 = int_to_ptr.hbm [resolvable:$true] %s285
          %s287 = sshll.u32 [#allocation8], 4
          %s288 = int_to_ptr.vmem [resolvable:$true] %s287
          %293 = dma.hbm_to_vmem [thread:$0]  %s286, 1536, %s288, [#allocation9], 128, 128, 8
        $region16: #{tpu_custom_call.1} parent=11 // pred_fallthru
          _
        // Predicated region
        $region17: #{tpu_custom_call.1} parent=11 // pred_check
          %p294 = pneg %p174
        $region18: #{tpu_custom_call.1} parent=11 // pred_check_branch
          %296 = sbr.rel (%p294) target = $region20
        $region19: #{tpu_custom_call.1} parent=11 // pred_region
          _
        $region20: #{tpu_custom_call.1} parent=11 // pred_fallthru
          _
        // Predicated region
        $region21: #{tpu_custom_call.1} parent=11 // pred_check
          %p297 = pneg %p195
        $region22: #{tpu_custom_call.1} parent=11 // pred_check_branch
          %299 = sbr.rel (%p297) target = $region24
        $region23: #{tpu_custom_call.1} parent=11 // pred_region
          _
        $region24: #{tpu_custom_call.1} parent=11 // pred_fallthru
          _
        // Predicated region
        $region25: #{tpu_custom_call.1} parent=11 // pred_check
          %p300 = pneg %p216
        $region26: #{tpu_custom_call.1} parent=11 // pred_check_branch
          %302 = sbr.rel (%p300) target = $region28
        $region27: #{tpu_custom_call.1} parent=11 // pred_region
          _
        $region28: #{tpu_custom_call.1} parent=11 // pred_fallthru
          _
        // Predicated region
        $region29: #{tpu_custom_call.1} parent=11 // pred_check
          %p303 = pneg %p237
        $region30: #{tpu_custom_call.1} parent=11 // pred_check_branch
          %305 = sbr.rel (%p303) target = $region32
        $region31: #{tpu_custom_call.1} parent=11 // pred_region
          _
        $region32: #{tpu_custom_call.1} parent=11 // pred_fallthru
          _
      $region12: #{tpu_custom_call.1} parent=5 // pred_fallthru
        _
      %p306 = scmp.lt.s32.totalorder %s24, 8
      // Predicated region
      $region33: #{tpu_custom_call.1} parent=5 // pred_check
        %p307 = pneg %p306
      $region34: #{tpu_custom_call.1} parent=5 // pred_check_branch
        %309 = sbr.rel (%p307) target = $region36
      $region35: #{tpu_custom_call.1} parent=5 // pred_region
        // Predicated region
        $region37: #{tpu_custom_call.1} parent=35 // pred_check
          %p310 = pneg %p58
        $region38: #{tpu_custom_call.1} parent=35 // pred_check_branch
          %312 = sbr.rel (%p310) target = $region40
        $region39: #{tpu_custom_call.1} parent=35 // pred_region
          %s313 = sand.u32 %s48, 1
          %s314 = scalar_lea.sflag [#allocation3], %s313
          %s315 = sand.u32 %s48, 1
          %s316 = smul.addr %s315, 32
          %s317 = scalar_lea.vmem [#allocation2], %s316
          %319 = vsyncadd %s314, 0
          %s320 = smul.addr %s31, 16
          %s321 = sadd.s32 %s32, %s320
          %s322 = smul.addr %s321, 8
          %s323 = scalar_lea.hbm %s0, %s322
          %s324 = sshll.u32 %s323, 4
          %s325 = int_to_ptr.hbm [resolvable:$true] %s324
          %s326 = sshll.u32 %s317, 4
          %s327 = int_to_ptr.vmem [resolvable:$true] %s326
          %332 = dma.hbm_to_vmem [thread:$0]  %s325, 512, %s327, %s314, 512, 128, 8
        $region40: #{tpu_custom_call.1} parent=35 // pred_fallthru
          _
        // Predicated region
        $region41: #{tpu_custom_call.1} parent=35 // pred_check
          %p333 = pneg %p92
        $region42: #{tpu_custom_call.1} parent=35 // pred_check_branch
          %335 = sbr.rel (%p333) target = $region44
        $region43: #{tpu_custom_call.1} parent=35 // pred_region
          %s336 = sand.u32 %s24, 1
          %s337 = scalar_lea.sflag [#allocation6], %s336
          %s338 = sand.u32 %s82, 1
          %s339 = smul.addr %s338, 32
          %s340 = scalar_lea.vmem [#allocation5], %s339
          %s341 = ssub.s32 %s32, 1
          %p342 = scmp.gt.s32.totalorder %s341, 0
          %s343 = scalar_select %p342, %s341, 0
          %345 = vsyncadd %s337, 0
          %s346 = smul.addr %s31, 16
          %s347 = sadd.s32 %s343, %s346
          %s348 = smul.addr %s347, 8
          %s349 = scalar_lea.hbm %s1, %s348
          %s350 = sshll.u32 %s349, 4
          %s351 = int_to_ptr.hbm [resolvable:$true] %s350
          %s352 = sshll.u32 %s340, 4
          %s353 = int_to_ptr.vmem [resolvable:$true] %s352
          %358 = dma.hbm_to_vmem [thread:$0]  %s351, 512, %s353, %s337, 512, 128, 8
        $region44: #{tpu_custom_call.1} parent=35 // pred_fallthru
          _
        // Predicated region
        $region45: #{tpu_custom_call.1} parent=35 // pred_check
          %p359 = pneg %p126
        $region46: #{tpu_custom_call.1} parent=35 // pred_check_branch
          %361 = sbr.rel (%p359) target = $region48
        $region47: #{tpu_custom_call.1} parent=35 // pred_region
          %s362 = sand.u32 %s24, 1
          %s363 = scalar_lea.sflag [#allocation6], %s362
          %s364 = sand.u32 %s116, 1
          %s365 = smul.addr %s364, 32
          %s366 = scalar_lea.vmem [#allocation7], %s365
          %s367 = sadd.s32 %s32, 1
          %p368 = scmp.lt.s32.totalorder %s367, 3
          %s369 = scalar_select %p368, %s367, 3
          %371 = vsyncadd %s363, 0
          %s372 = smul.addr %s31, 16
          %s373 = sadd.s32 %s369, %s372
          %s374 = smul.addr %s373, 8
          %s375 = scalar_lea.hbm %s2, %s374
          %s376 = sshll.u32 %s375, 4
          %s377 = int_to_ptr.hbm [resolvable:$true] %s376
          %s378 = sshll.u32 %s366, 4
          %s379 = int_to_ptr.vmem [resolvable:$true] %s378
          %384 = dma.hbm_to_vmem [thread:$0]  %s377, 512, %s379, %s363, 512, 128, 8
        $region48: #{tpu_custom_call.1} parent=35 // pred_fallthru
          _
      $region36: #{tpu_custom_call.1} parent=5 // pred_fallthru
        _
      %p385 = scmp.le.s32.totalorder 1, %s24
      %p386 = scmp.lt.s32.totalorder %s24, 9
      %p387 = pnand %p385, %p386
      %p388 = pneg %p387
      // Predicated region
      $region49: #{tpu_custom_call.1} parent=5 // pred_check
        _
      $region50: #{tpu_custom_call.1} parent=5 // pred_check_branch
        %390 = sbr.rel (%p387) target = $region52
      $region51: #{tpu_custom_call.1} parent=5 // pred_region
        %s391 = ssub.s32 %s24, 1
        %s392 = sand.u32 %s51, 1
        %s393 = scalar_lea.sflag [#allocation3], %s392
        %s394 = sand.u32 %s51, 1
        %s395 = smul.addr %s394, 32
        %s396 = scalar_lea.vmem [#allocation2], %s395
        // Predicated region
        $region53: #{tpu_custom_call.1} parent=51 // pred_check
          %p397 = pneg %p64
        $region54: #{tpu_custom_call.1} parent=51 // pred_check_branch
          %399 = sbr.rel (%p397) target = $region56
        $region55: #{tpu_custom_call.1} parent=51 // pred_region
          %401 = dma.done %s393, 512
        $region56: #{tpu_custom_call.1} parent=51 // pred_fallthru
          _
        %s402 = sand.u32 %s29, 1
        %s403 = scalar_lea.sflag [#allocation6], %s402
        %s404 = sand.u32 %s85, 1
        %s405 = smul.addr %s404, 32
        %s406 = scalar_lea.vmem [#allocation5], %s405
        // Predicated region
        $region57: #{tpu_custom_call.1} parent=51 // pred_check
          %p407 = pneg %p98
        $region58: #{tpu_custom_call.1} parent=51 // pred_check_branch
          %409 = sbr.rel (%p407) target = $region60
        $region59: #{tpu_custom_call.1} parent=51 // pred_region
          %411 = dma.done %s403, 512
        $region60: #{tpu_custom_call.1} parent=51 // pred_fallthru
          _
        %s412 = sand.u32 %s29, 1
        %s413 = scalar_lea.sflag [#allocation6], %s412
        %s414 = sand.u32 %s119, 1
        %s415 = smul.addr %s414, 32
        %s416 = scalar_lea.vmem [#allocation7], %s415
        // Predicated region
        $region61: #{tpu_custom_call.1} parent=51 // pred_check
          %p417 = pneg %p132
        $region62: #{tpu_custom_call.1} parent=51 // pred_check_branch
          %419 = sbr.rel (%p417) target = $region64
        $region63: #{tpu_custom_call.1} parent=51 // pred_region
          %421 = dma.done %s413, 512
        $region64: #{tpu_custom_call.1} parent=51 // pred_fallthru
          _
        // Predicated region
        $region65: #{tpu_custom_call.1} parent=51 // pred_check
          %p422 = pneg %p153
        $region66: #{tpu_custom_call.1} parent=51 // pred_check_branch
          %424 = sbr.rel (%p422) target = $region68
        $region67: #{tpu_custom_call.1} parent=51 // pred_region
          %426 = dma.done [#allocation9], 1536
        $region68: #{tpu_custom_call.1} parent=51 // pred_fallthru
          _
        %s427 = sand.u32 %s51, 1
        %s428 = scalar_lea.sflag [#allocation3], %s427
        %s429 = sand.u32 %s51, 1
        %s430 = smul.addr %s429, 32
        %s431 = scalar_lea.vmem [#allocation2], %s430
        %p432 = pneg %p64
        %p433 = pneg %p61
        %s434 = sand.u32 %s29, 1
        %s435 = scalar_lea.sflag [#allocation6], %s434
        %s436 = sand.u32 %s85, 1
        %s437 = smul.addr %s436, 32
        %s438 = scalar_lea.vmem [#allocation5], %s437
        %p439 = pneg %p98
        %p440 = pneg %p95
        %s441 = sand.u32 %s29, 1
        %s442 = scalar_lea.sflag [#allocation6], %s441
        %s443 = sand.u32 %s119, 1
        %s444 = smul.addr %s443, 32
        %s445 = scalar_lea.vmem [#allocation7], %s444
        %p446 = pneg %p132
        %p447 = pneg %p129
        %p448 = pneg %p153
        %p449 = pneg %p150
        %p450 = pneg %p174
        %p451 = pneg %p171
        %p452 = pneg %p195
        %p453 = pneg %p192
        %p454 = pneg %p216
        %p455 = pneg %p213
        %p456 = pneg %p237
        %p457 = pneg %p234
        %p458 = pneg %p265
        %p459 = pneg %p262
        %s460 = sand.u32 %s252, 1
        %s461 = scalar_lea.sflag [#allocation4], %s460
        %s462 = sand.u32 %s252, 1
        %s463 = smul.addr %s462, 32
        %s464 = scalar_lea.vmem [#allocation10], %s463
        %s465 = ssub.s32 %s34, 1
        %p466 = scmp.gt.s32.totalorder %s465, 0
        %s467 = scalar_select %p466, %s465, 0
        %s468 = sadd.s32 %s34, 1
        %p469 = scmp.lt.s32.totalorder %s468, 3
        %s470 = scalar_select %p469, %s468, 3
        %p471 = scmp.eq.s32.totalorder %s34, 0
        %p472 = scmp.eq.s32.totalorder %s34, 3
        %v473 = vld [vmem:[%s396] sm:$0xff]
        %v474 = vld [vmem:[%s396 + $0x8] sm:$0xff]
        %v475 = vld [vmem:[%s396 + $0x10] sm:$0xff]
        %v476 = vld [vmem:[%s396 + $0x18] sm:$0xff]
        %v477 = vmul.f32 %v473, 0.2
        %v478 = vmul.f32 %v474, 0.2
        %v479 = vmul.f32 %v475, 0.2
        %v480 = vmul.f32 %v476, 0.2
        %v481 = vmax.f32 %v473, %v477
        %v482 = vmax.f32 %v474, %v478
        %v483 = vmax.f32 %v475, %v479
        %v484 = vmax.f32 %v476, %v480
        %v485 = vld [vmem:[%s406] sm:$0xff]
        %v486 = vld [vmem:[%s406 + $0x8] sm:$0xff]
        %v487 = vld [vmem:[%s406 + $0x10] sm:$0xff]
        %v488 = vld [vmem:[%s406 + $0x18] sm:$0xff]
        %v489 = vmul.f32 %v485, 0.2
        %v490 = vmul.f32 %v486, 0.2
        %v491 = vmul.f32 %v487, 0.2
        %v492 = vmul.f32 %v488, 0.2
        %v493 = vmax.f32 %v485, %v489
        %v494 = vmax.f32 %v486, %v490
        %v495 = vmax.f32 %v487, %v491
        %v496 = vmax.f32 %v488, %v492
        %v497 = vld [vmem:[%s416] sm:$0xff]
        %v498 = vld [vmem:[%s416 + $0x8] sm:$0xff]
        %v499 = vld [vmem:[%s416 + $0x10] sm:$0xff]
        %v500 = vld [vmem:[%s416 + $0x18] sm:$0xff]
        %v501 = vmul.f32 %v497, 0.2
        %v502 = vmul.f32 %v498, 0.2
        %v503 = vmul.f32 %v499, 0.2
        %v504 = vmul.f32 %v500, 0.2
        %v505 = vmax.f32 %v497, %v501
        %v506 = vmax.f32 %v498, %v502
        %v507 = vmax.f32 %v499, %v503
        %v508 = vmax.f32 %v500, %v504
        %v509 = vlaneseq
        %v510 = vand.u32 %v509, 127
        %s511 = scalar_select %p471, 1, 0
        %v512 = vstv %s511
        %vm513 = vcmp.eq.s32.totalorder %v512, 1
        %518 = vrot.lane.b32.xlu0 %v493, 2
        %v519 = vpop.permute.xlu0 %518
        %520 = vrot.lane.b32.xlu0 %v494, 2
        %v521 = vpop.permute.xlu0 %520
        %522 = vrot.lane.b32.xlu0 %v495, 2
        %v523 = vpop.permute.xlu0 %522
        %524 = vrot.lane.b32.xlu0 %v496, 2
        %v525 = vpop.permute.xlu0 %524
        %v530 = vsel %vm513, %v481, %v519
        %v531 = vsel %vm513, %v482, %v521
        %v532 = vsel %vm513, %v483, %v523
        %v533 = vsel %vm513, %v484, %v525
        %vm534 = vcmp.eq.s32.totalorder %v510, 127
        %v535 = vsel %vm534, 1, 0
        %vm536 = vcmp.eq.s32.totalorder %v535, 1
        %538 = vset.pattern.permute.xlu0 1
        %539 = vperm.xlu0 %538, %v530
        %v540 = vpop.permute.xlu0 %539
        %543 = vset.pattern.permute.xlu0 1
        %544 = vperm.xlu0 %543, %v531
        %v545 = vpop.permute.xlu0 %544
        %548 = vset.pattern.permute.xlu0 1
        %549 = vperm.xlu0 %548, %v532
        %v550 = vpop.permute.xlu0 %549
        %553 = vset.pattern.permute.xlu0 1
        %554 = vperm.xlu0 %553, %v533
        %v555 = vpop.permute.xlu0 %554
        %v557 = vsel %vm536, %v540, %v493
        %v558 = vsel %vm536, %v545, %v494
        %v559 = vsel %vm536, %v550, %v495
        %v560 = vsel %vm536, %v555, %v496
        %s561 = scalar_select %p472, 1, 0
        %v562 = vstv %s561
        %vm563 = vcmp.eq.s32.totalorder %v562, 1
        %568 = vrot.lane.b32.xlu0 %v505, 126
        %v569 = vpop.permute.xlu0 %568
        %570 = vrot.lane.b32.xlu0 %v506, 126
        %v571 = vpop.permute.xlu0 %570
        %572 = vrot.lane.b32.xlu0 %v507, 126
        %v573 = vpop.permute.xlu0 %572
        %574 = vrot.lane.b32.xlu0 %v508, 126
        %v575 = vpop.permute.xlu0 %574
        %v580 = vsel %vm563, %v481, %v569
        %v581 = vsel %vm563, %v482, %v571
        %v582 = vsel %vm563, %v483, %v573
        %v583 = vsel %vm563, %v484, %v575
        %vm584 = vcmp.eq.s32.totalorder %v510, 0
        %v585 = vsel %vm584, 1, 0
        %vm586 = vcmp.eq.s32.totalorder %v585, 1
        %588 = vset.pattern.permute.xlu0 126
        %589 = vperm.xlu0 %588, %v580
        %v590 = vpop.permute.xlu0 %589
        %593 = vset.pattern.permute.xlu0 126
        %594 = vperm.xlu0 %593, %v581
        %v595 = vpop.permute.xlu0 %594
        %598 = vset.pattern.permute.xlu0 126
        %599 = vperm.xlu0 %598, %v582
        %v600 = vpop.permute.xlu0 %599
        %603 = vset.pattern.permute.xlu0 126
        %604 = vperm.xlu0 %603, %v583
        %v605 = vpop.permute.xlu0 %604
        %v607 = vsel %vm586, %v590, %v505
        %v608 = vsel %vm586, %v595, %v506
        %v609 = vsel %vm586, %v600, %v507
        %v610 = vsel %vm586, %v605, %v508
        %611 = vrot.lane.b32.xlu0 %v557, 1
        %v612 = vpop.permute.xlu0 %611
        %613 = vrot.lane.b32.xlu0 %v558, 1
        %v614 = vpop.permute.xlu0 %613
        %615 = vrot.lane.b32.xlu0 %v559, 1
        %v616 = vpop.permute.xlu0 %615
        %617 = vrot.lane.b32.xlu0 %v560, 1
        %v618 = vpop.permute.xlu0 %617
        %619 = vrot.lane.b32.xlu0 %v481, 1
        %v620 = vpop.permute.xlu0 %619
        %621 = vrot.lane.b32.xlu0 %v482, 1
        %v622 = vpop.permute.xlu0 %621
        %623 = vrot.lane.b32.xlu0 %v483, 1
        %v624 = vpop.permute.xlu0 %623
        %625 = vrot.lane.b32.xlu0 %v484, 1
        %v626 = vpop.permute.xlu0 %625
        %vm627 = vcmp.lt.s32.totalorder %v510, 1
        %v628 = vsel %vm627, %v612, %v620
        %v629 = vsel %vm627, %v614, %v622
        %v630 = vsel %vm627, %v616, %v624
        %v631 = vsel %vm627, %v618, %v626
        %v632 = vld [vmem:[#allocation8] sm:$0xff]
        %v633 = vld [vmem:[#allocation8 + $0x8] sm:$0xff]
        %v634 = vld [vmem:[#allocation8 + $0x10] sm:$0xff]
        %v635 = vld [vmem:[#allocation8 + $0x18] sm:$0xff]
        %s636 = scalar_lea.vmem [#allocation8], 32
        %v637 = vld [vmem:[%s636] sm:$0xff]
        %v638 = vld [vmem:[%s636 + $0x8] sm:$0xff]
        %v639 = vld [vmem:[%s636 + $0x10] sm:$0xff]
        %v640 = vld [vmem:[%s636 + $0x18] sm:$0xff]
        %vm641 = vcmask 261120
        %v643 = vsel %vm641, %v637, 0
        %v646 = vsel %vm641, %v638, 0
        %v649 = vsel %vm641, %v639, 0
        %v652 = vsel %vm641, %v640, 0
        %654 = vmatpush.msra.mxu0 0.0
        %655 = vmatpush.msra.mxu0 0.0
        %656 = vmatpush.msra.mxu0 0.0
        %657 = vmatpush.msra.mxu0 0.0
        %658 = vmatpush.msra.mxu0 0.0
        %659 = vmatpush.msra.mxu0 0.0
        %660 = vmatpush.msra.mxu0 0.0
        %661 = vmatpush.msra.mxu0 0.0
        %662 = vmatpush.msra.mxu0 0.0
        %663 = vmatpush.msra.mxu0 0.0
        %664 = vmatpush.msra.mxu0 0.0
        %665 = vmatpush.msra.mxu0 0.0
        %666 = vmatpush.msra.mxu0 %v484
        %667 = vmatpush.msra.mxu0 %v483
        %668 = vmatpush.msra.mxu0 %v482
        %669 = vmatpush.msra.mxu0 %v481
        %670 = vmatmul.f32.gmra.mxu0 %v643
        %v671 = vpop.f32.mrf.mxu0
        %v672 = vadd.f32 0.0, %v671
        %673 = vmatmul.f32.gmra.mxu0 %v646
        %v674 = vpop.f32.mrf.mxu0
        %v675 = vadd.f32 0.0, %v674
        %676 = vmatmul.f32.gmra.mxu0 %v649
        %v677 = vpop.f32.mrf.mxu0
        %v678 = vadd.f32 0.0, %v677
        %679 = vmatmul.f32.gmra.mxu0 %v652
        %v680 = vpop.f32.mrf.mxu0
        %v681 = vadd.f32 0.0, %v680
        %682 = vdwg.mxu0
        %v684 = vsel %vm641, %v632, 0
        %v687 = vsel %vm641, %v633, 0
        %v690 = vsel %vm641, %v634, 0
        %v693 = vsel %vm641, %v635, 0
        %695 = vmatpush.msra.mxu0 0.0
        %696 = vmatpush.msra.mxu0 0.0
        %697 = vmatpush.msra.mxu0 0.0
        %698 = vmatpush.msra.mxu0 0.0
        %699 = vmatpush.msra.mxu0 0.0
        %700 = vmatpush.msra.mxu0 0.0
        %701 = vmatpush.msra.mxu0 0.0
        %702 = vmatpush.msra.mxu0 0.0
        %703 = vmatpush.msra.mxu0 0.0
        %704 = vmatpush.msra.mxu0 0.0
        %705 = vmatpush.msra.mxu0 0.0
        %706 = vmatpush.msra.mxu0 0.0
        %707 = vmatpush.msra.mxu0 %v631
        %708 = vmatpush.msra.mxu0 %v630
        %709 = vmatpush.msra.mxu0 %v629
        %710 = vmatpush.msra.mxu0 %v628
        %711 = vmatmul.f32.gmra.mxu0 %v684
        %v712 = vpop.f32.mrf.mxu0
        %v713 = vadd.f32 %v672, %v712
        %714 = vmatmul.f32.gmra.mxu0 %v687
        %v715 = vpop.f32.mrf.mxu0
        %v716 = vadd.f32 %v675, %v715
        %717 = vmatmul.f32.gmra.mxu0 %v690
        %v718 = vpop.f32.mrf.mxu0
        %v719 = vadd.f32 %v678, %v718
        %720 = vmatmul.f32.gmra.mxu0 %v693
        %v721 = vpop.f32.mrf.mxu0
        %v722 = vadd.f32 %v681, %v721
        %723 = vdwg.mxu0
        %724 = vrot.lane.b32.xlu0 %v481, 127
        %v725 = vpop.permute.xlu0 %724
        %726 = vrot.lane.b32.xlu0 %v482, 127
        %v727 = vpop.permute.xlu0 %726
        %728 = vrot.lane.b32.xlu0 %v483, 127
        %v729 = vpop.permute.xlu0 %728
        %730 = vrot.lane.b32.xlu0 %v484, 127
        %v731 = vpop.permute.xlu0 %730
        %732 = vrot.lane.b32.xlu0 %v607, 127
        %v733 = vpop.permute.xlu0 %732
        %734 = vrot.lane.b32.xlu0 %v608, 127
        %v735 = vpop.permute.xlu0 %734
        %736 = vrot.lane.b32.xlu0 %v609, 127
        %v737 = vpop.permute.xlu0 %736
        %738 = vrot.lane.b32.xlu0 %v610, 127
        %v739 = vpop.permute.xlu0 %738
        %vm740 = vcmp.lt.s32.totalorder %v510, 127
        %v741 = vsel %vm740, %v725, %v733
        %v742 = vsel %vm740, %v727, %v735
        %v743 = vsel %vm740, %v729, %v737
        %v744 = vsel %vm740, %v731, %v739
        %s745 = scalar_lea.vmem [#allocation8], 64
        %v746 = vld [vmem:[%s745] sm:$0xff]
        %v747 = vld [vmem:[%s745 + $0x8] sm:$0xff]
        %v748 = vld [vmem:[%s745 + $0x10] sm:$0xff]
        %v749 = vld [vmem:[%s745 + $0x18] sm:$0xff]
        %v751 = vsel %vm641, %v746, 0
        %v754 = vsel %vm641, %v747, 0
        %v757 = vsel %vm641, %v748, 0
        %v760 = vsel %vm641, %v749, 0
        %762 = vmatpush.msra.mxu0 0.0
        %763 = vmatpush.msra.mxu0 0.0
        %764 = vmatpush.msra.mxu0 0.0
        %765 = vmatpush.msra.mxu0 0.0
        %766 = vmatpush.msra.mxu0 0.0
        %767 = vmatpush.msra.mxu0 0.0
        %768 = vmatpush.msra.mxu0 0.0
        %769 = vmatpush.msra.mxu0 0.0
        %770 = vmatpush.msra.mxu0 0.0
        %771 = vmatpush.msra.mxu0 0.0
        %772 = vmatpush.msra.mxu0 0.0
        %773 = vmatpush.msra.mxu0 0.0
        %774 = vmatpush.msra.mxu0 %v744
        %775 = vmatpush.msra.mxu0 %v743
        %776 = vmatpush.msra.mxu0 %v742
        %777 = vmatpush.msra.mxu0 %v741
        %778 = vmatmul.f32.gmra.mxu0 %v751
        %v779 = vpop.f32.mrf.mxu0
        %v780 = vadd.f32 0.0, %v779
        %781 = vmatmul.f32.gmra.mxu0 %v754
        %v782 = vpop.f32.mrf.mxu0
        %v783 = vadd.f32 0.0, %v782
        %784 = vmatmul.f32.gmra.mxu0 %v757
        %v785 = vpop.f32.mrf.mxu0
        %v786 = vadd.f32 0.0, %v785
        %787 = vmatmul.f32.gmra.mxu0 %v760
        %v788 = vpop.f32.mrf.mxu0
        %v789 = vadd.f32 0.0, %v788
        %790 = vdwg.mxu0
        %v791 = vadd.f32 %v713, %v780
        %v792 = vadd.f32 %v716, %v783
        %v793 = vadd.f32 %v719, %v786
        %v794 = vadd.f32 %v722, %v789
        %v795 = vld [vmem:[%s6] sm:$0xff]
        %v796 = vld [vmem:[%s6 + $0x8] sm:$0xff]
        %v797 = vld [vmem:[%s6 + $0x10] sm:$0xff]
        %v798 = vld [vmem:[%s6 + $0x18] sm:$0xff]
        %800 = vset.pattern.permute.xlu0 0
        %801 = vperm.xlu0 %800, %v795
        %v802 = vpop.permute.xlu0 %801
        %805 = vset.pattern.permute.xlu0 0
        %806 = vperm.xlu0 %805, %v796
        %v807 = vpop.permute.xlu0 %806
        %810 = vset.pattern.permute.xlu0 0
        %811 = vperm.xlu0 %810, %v797
        %v812 = vpop.permute.xlu0 %811
        %815 = vset.pattern.permute.xlu0 0
        %816 = vperm.xlu0 %815, %v798
        %v817 = vpop.permute.xlu0 %816
        %v819 = vadd.f32 %v791, %v802
        %v820 = vadd.f32 %v792, %v807
        %v821 = vadd.f32 %v793, %v812
        %v822 = vadd.f32 %v794, %v817
        %v823 = vmul.f32 %v819, 0.2
        %v824 = vmul.f32 %v820, 0.2
        %v825 = vmul.f32 %v821, 0.2
        %v826 = vmul.f32 %v822, 0.2
        %v827 = vmax.f32 %v819, %v823
        %v828 = vmax.f32 %v820, %v824
        %v829 = vmax.f32 %v821, %v825
        %v830 = vmax.f32 %v822, %v826
        %v831 = vld [vmem:[%s4] sm:$0xff]
        %v832 = vld [vmem:[%s4 + $0x8] sm:$0xff]
        %v833 = vld [vmem:[%s4 + $0x10] sm:$0xff]
        %v834 = vld [vmem:[%s4 + $0x18] sm:$0xff]
        %v835 = vld [vmem:[%s5] sm:$0xff]
        %v836 = vld [vmem:[%s5 + $0x8] sm:$0xff]
        %v837 = vld [vmem:[%s5 + $0x10] sm:$0xff]
        %v838 = vld [vmem:[%s5 + $0x18] sm:$0xff]
        %v840 = vsel %vm641, %v835, 0
        %v843 = vsel %vm641, %v836, 0
        %v846 = vsel %vm641, %v837, 0
        %v849 = vsel %vm641, %v838, 0
        %851 = vmatpush.msra.mxu0 0.0
        %852 = vmatpush.msra.mxu0 0.0
        %853 = vmatpush.msra.mxu0 0.0
        %854 = vmatpush.msra.mxu0 0.0
        %855 = vmatpush.msra.mxu0 0.0
        %856 = vmatpush.msra.mxu0 0.0
        %857 = vmatpush.msra.mxu0 0.0
        %858 = vmatpush.msra.mxu0 0.0
        %859 = vmatpush.msra.mxu0 0.0
        %860 = vmatpush.msra.mxu0 0.0
        %861 = vmatpush.msra.mxu0 0.0
        %862 = vmatpush.msra.mxu0 0.0
        %863 = vmatpush.msra.mxu0 %v476
        %864 = vmatpush.msra.mxu0 %v475
        %865 = vmatpush.msra.mxu0 %v474
        %866 = vmatpush.msra.mxu0 %v473
        %867 = vmatmul.f32.gmra.mxu0 %v840
        %v868 = vpop.f32.mrf.mxu0
        %v869 = vadd.f32 0.0, %v868
        %870 = vmatmul.f32.gmra.mxu0 %v843
        %v871 = vpop.f32.mrf.mxu0
        %v872 = vadd.f32 0.0, %v871
        %873 = vmatmul.f32.gmra.mxu0 %v846
        %v874 = vpop.f32.mrf.mxu0
        %v875 = vadd.f32 0.0, %v874
        %876 = vmatmul.f32.gmra.mxu0 %v849
        %v877 = vpop.f32.mrf.mxu0
        %v878 = vadd.f32 0.0, %v877
        %879 = vdwg.mxu0
        %v881 = vsel %vm641, %v831, 0
        %v884 = vsel %vm641, %v832, 0
        %v887 = vsel %vm641, %v833, 0
        %v890 = vsel %vm641, %v834, 0
        %892 = vmatpush.msra.mxu0 0.0
        %893 = vmatpush.msra.mxu0 0.0
        %894 = vmatpush.msra.mxu0 0.0
        %895 = vmatpush.msra.mxu0 0.0
        %896 = vmatpush.msra.mxu0 0.0
        %897 = vmatpush.msra.mxu0 0.0
        %898 = vmatpush.msra.mxu0 0.0
        %899 = vmatpush.msra.mxu0 0.0
        %900 = vmatpush.msra.mxu0 0.0
        %901 = vmatpush.msra.mxu0 0.0
        %902 = vmatpush.msra.mxu0 0.0
        %903 = vmatpush.msra.mxu0 0.0
        %904 = vmatpush.msra.mxu0 %v830
        %905 = vmatpush.msra.mxu0 %v829
        %906 = vmatpush.msra.mxu0 %v828
        %907 = vmatpush.msra.mxu0 %v827
        %908 = vmatmul.f32.gmra.mxu0 %v881
        %v909 = vpop.f32.mrf.mxu0
        %v910 = vadd.f32 %v869, %v909
        %911 = vmatmul.f32.gmra.mxu0 %v884
        %v912 = vpop.f32.mrf.mxu0
        %v913 = vadd.f32 %v872, %v912
        %914 = vmatmul.f32.gmra.mxu0 %v887
        %v915 = vpop.f32.mrf.mxu0
        %v916 = vadd.f32 %v875, %v915
        %917 = vmatmul.f32.gmra.mxu0 %v890
        %v918 = vpop.f32.mrf.mxu0
        %v919 = vadd.f32 %v878, %v918
        %920 = vdwg.mxu0
        %v921 = vld [vmem:[%s7] sm:$0xff]
        %v922 = vld [vmem:[%s7 + $0x8] sm:$0xff]
        %v923 = vld [vmem:[%s7 + $0x10] sm:$0xff]
        %v924 = vld [vmem:[%s7 + $0x18] sm:$0xff]
        %926 = vset.pattern.permute.xlu0 0
        %927 = vperm.xlu0 %926, %v921
        %v928 = vpop.permute.xlu0 %927
        %931 = vset.pattern.permute.xlu0 0
        %932 = vperm.xlu0 %931, %v922
        %v933 = vpop.permute.xlu0 %932
        %936 = vset.pattern.permute.xlu0 0
        %937 = vperm.xlu0 %936, %v923
        %v938 = vpop.permute.xlu0 %937
        %941 = vset.pattern.permute.xlu0 0
        %942 = vperm.xlu0 %941, %v924
        %v943 = vpop.permute.xlu0 %942
        %v945 = vadd.f32 %v910, %v928
        %v946 = vadd.f32 %v913, %v933
        %v947 = vadd.f32 %v916, %v938
        %v948 = vadd.f32 %v919, %v943
        %949 = vst [vmem:[%s464] sm:$0xff] %v945
        %950 = vst [vmem:[%s464 + $0x8] sm:$0xff] %v946
        %951 = vst [vmem:[%s464 + $0x10] sm:$0xff] %v947
        %952 = vst [vmem:[%s464 + $0x18] sm:$0xff] %v948
        %s953 = sand.u32 %s252, 1
        %s954 = scalar_lea.sflag [#allocation4], %s953
        %s955 = sand.u32 %s252, 1
        %s956 = smul.addr %s955, 32
        %s957 = scalar_lea.vmem [#allocation10], %s956
        // Predicated region
        $region69: #{tpu_custom_call.1} parent=51 // pred_check
          %p958 = pneg %p262
        $region70: #{tpu_custom_call.1} parent=51 // pred_check_branch
          %960 = sbr.rel (%p958) target = $region72
        $region71: #{tpu_custom_call.1} parent=51 // pred_region
          %962 = vsyncadd %s954, 0
          %s963 = smul.addr %s33, 16
          %s964 = sadd.s32 %s34, %s963
          %s965 = smul.addr %s964, 8
          %s966 = scalar_lea.hbm %s8, %s965
          %s967 = sshll.u32 %s957, 4
          %s968 = int_to_ptr.vmem [resolvable:$true] %s967
          %s969 = sshll.u32 %s966, 4
          %s970 = int_to_ptr.hbm [resolvable:$true] %s969
          %975 = dma.vmem_to_hbm [thread:$0]  %s968, 512, %s970, %s954, 128, 512, 8
        $region72: #{tpu_custom_call.1} parent=51 // pred_fallthru
          _
      $region52: #{tpu_custom_call.1} parent=5 // pred_fallthru
        _
      %p976 = scmp.le.s32.totalorder 2, %s24
      // Predicated region
      $region73: #{tpu_custom_call.1} parent=5 // pred_check
        %p977 = pneg %p976
      $region74: #{tpu_custom_call.1} parent=5 // pred_check_branch
        %979 = sbr.rel (%p977) target = $region76
      $region75: #{tpu_custom_call.1} parent=5 // pred_region
        %s980 = ssub.s32 %s24, 2
        // Predicated region
        $region77: #{tpu_custom_call.1} parent=75 // pred_check
          %p981 = pneg %p268
        $region78: #{tpu_custom_call.1} parent=75 // pred_check_branch
          %983 = sbr.rel (%p981) target = $region80
        $region79: #{tpu_custom_call.1} parent=75 // pred_region
          %s984 = sand.u32 %s253, 1
          %s985 = scalar_lea.sflag [#allocation4], %s984
          %s986 = sand.u32 %s253, 1
          %s987 = smul.addr %s986, 32
          %s988 = scalar_lea.vmem [#allocation10], %s987
          %990 = dma.done %s985, 512
        $region80: #{tpu_custom_call.1} parent=75 // pred_fallthru
          _
      $region76: #{tpu_custom_call.1} parent=5 // pred_fallthru
        _
    $region6: #{tpu_custom_call.1} parent=1 // loop_footer
      %s28 = sadd.s32 1, %s24
    $region7: #{tpu_custom_call.1} parent=1 // loop_footer_branch
      %23 = sbr.rel target = $region3
    $region8: #{tpu_custom_call.1} parent=1 // loop_exit
      _
    %991 = vsyncpa [#allocation3], 1
    %s992 = scalar_lea.sflag [#allocation3], 1
    %993 = vsyncpa %s992, 1
    %994 = vsyncpa [#allocation6], 1
    %s995 = scalar_lea.sflag [#allocation6], 1
    %996 = vsyncpa %s995, 1
    %997 = vsyncpa [#allocation9], 1
    %998 = vsyncpa [#allocation4], 1
    %s999 = scalar_lea.sflag [#allocation4], 1
    %1000 = vsyncpa %s999, 1

</llo_original>
